<compile_context>
chip_gen: v5e
topology: v5e:2x2
jax: 0.10.0
libtpu: 0.0.40
codegen_flags: <defaults>
</compile_context>

<pallas_src>
import math

import jax
import jax.numpy as jnp
from jax import lax
from jax.experimental import pallas as pl
from jax.experimental.pallas import tpu as pltpu


# ---------------------------------------------------------------------------
# Kernels
# ---------------------------------------------------------------------------
def _sin_emb_kernel(t_ref, f_ref, p_ref, o_ref):
    # t_ref: (TB, 1) f32, f_ref/p_ref: (1, dim) f32 (resident), o_ref: (TB, dim).
    # One VPU broadcast-FMA + one EUP sin + one lane-dense store.
    args = t_ref[...] * f_ref[...] + p_ref[...]
    o_ref[...] = jnp.sin(args).astype(o_ref.dtype)


def _sin_emb_packed_kernel(t_ref, sf_ref, p_ref, o_ref):
    # Lane-packed path (dim < 128): k original rows per output row.
    # t_ref: (TB, k) f32; sf_ref: (k, k*dim) = kron(I_k, freqs_row) (resident);
    # p_ref: (1, k*dim); o_ref: (TB, k*dim).
    # The tiny matmul broadcasts each of the k time values across its dim-wide
    # lane group AND applies the frequency scaling, on the otherwise-idle MXU.
    args = jnp.dot(
        t_ref[...], sf_ref[...],
        preferred_element_type=jnp.float32,
        precision=lax.Precision.HIGHEST,   # keep f32 accuracy for large t
    )
    o_ref[...] = jnp.sin(args + p_ref[...]).astype(o_ref.dtype)


# ---------------------------------------------------------------------------
# Wrapper helpers
# ---------------------------------------------------------------------------
def _tpu_config():
    """(target_block_bytes, vmem_limit_bytes, dimension_semantics) per chip."""
    try:
        kind = jax.devices()[0].device_kind.lower()
    except Exception:  # pragma: no cover - defensive
        kind = ""
    if "v7" in kind:
        # 64 MiB physical VMEM -> smaller blocks; CORE_PARALLEL actually shards
        # grid steps across the 2 TensorCores (plain "parallel" does not).
        sem = getattr(pltpu, "CORE_PARALLEL", "parallel")
        return 6 << 20, 32 << 20, (sem,)
    if "v6" in kind:
        # 128 MiB physical VMEM: bigger blocks amortize per-step overhead.
        return 16 << 20, 96 << 20, ("parallel",)
    # v5e / unknown: conservative.  Explicit 32 MiB limit (v5e default is 16).
    return 8 << 20, 32 << 20, ("parallel",)


def _choose_block_rows(rows: int, row_bytes: int, target_bytes: int, sub: int) -> int:
    tb = max(sub, target_bytes // max(row_bytes, 1))
    if tb >= rows:
        return rows
    return max(sub, (tb // sub) * sub)


# ---------------------------------------------------------------------------
# Public entry point
# ---------------------------------------------------------------------------
def sinusoidal_pos_emb(time: jax.Array, dim: int, *, out_dtype=jnp.float32,
                       block_rows: int | None = None) -> jax.Array:
    """Pallas equivalent of SinusoidalPosEmb(dim)(time).

    out_dtype defaults to float32 to match the PyTorch module; pass
    jnp.bfloat16 to halve the HBM writeback (math stays f32, cast at the store).
    NOTE: for tiny B*dim the plain-JAX `_reference` beats kernel launch overhead;
    this kernel targets large batches where the HBM writeback dominates.
    """
    assert time.ndim == 1, "time must be a 1-D tensor of shape (B,)"
    assert dim % 2 == 0, "dim must be even"
    assert dim >= 4, "dim must be >= 4 (half_dim - 1 == 0 divides by zero at dim == 2)"

    b = time.shape[0]
    half = dim // 2

    # Wrapper-side (trace-time) precompute: frequency row tiled twice to full
    # width, plus the phase row that turns the cos half into sin(x + pi/2).
    scale = math.log(10000.0) / (half - 1)
    freqs = jnp.exp(jnp.arange(half, dtype=jnp.float32) * (-scale))
    freqs_full = jnp.concatenate([freqs, freqs]).reshape(1, dim)
    phase_row = jnp.concatenate([
        jnp.zeros((half,), jnp.float32),
        jnp.full((half,), math.pi / 2.0, dtype=jnp.float32),
    ]).reshape(1, dim)

    # Lane packing factor: for dim < 128 view the row-major output as
    # (b/k, k*dim) with k*dim == 128 so the writeback is lane-dense.
    k = 1
    if dim < 128 and 128 % dim == 0 and b % (128 // dim) == 0:
        k = 128 // dim
    rows, width = b // k, k * dim

    itemsize = jnp.dtype(out_dtype).itemsize
    sub = 8 * max(1, 4 // itemsize)          # 8 rows for f32, 16 for bf16/f16
    target_bytes, vmem_limit, dim_sem = _tpu_config()

    if block_rows is not None:
        tb = min(block_rows, rows)
    else:
        tb = _choose_block_rows(rows, width * itemsize, target_bytes, sub)
    if tb < rows:
        tb = max(sub, (tb // sub) * sub)
    tb = min(tb, rows)

    grid = (pl.cdiv(rows, tb),)
    compiler_params = pltpu.CompilerParams(
        dimension_semantics=dim_sem,
        vmem_limit_bytes=vmem_limit,
    )
    t32 = time.astype(jnp.float32)

    if k > 1:
        t_packed = t32.reshape(rows, k)
        sel_freq = jnp.kron(jnp.eye(k, dtype=jnp.float32), freqs_full)  # (k, width)
        phase_packed = jnp.tile(phase_row, (1, k))                      # (1, width)
        out = pl.pallas_call(
            _sin_emb_packed_kernel,
            out_shape=jax.ShapeDtypeStruct((rows, width), out_dtype),
            grid=grid,
            in_specs=[
                pl.BlockSpec((tb, k), lambda i: (i, 0)),        # packed time tile
                pl.BlockSpec((k, width), lambda i: (0, 0)),     # resident sel*freq
                pl.BlockSpec((1, width), lambda i: (0, 0)),     # resident phase
            ],
            out_specs=pl.BlockSpec((tb, width), lambda i: (i, 0)),
            compiler_params=compiler_params,
        )(t_packed, sel_freq, phase_packed)
        # Row-major (b/k, k*dim) -> (b, dim) is a free metadata reshape.
        return out.reshape(b, dim)

    t2d = t32.reshape(b, 1)
    return pl.pallas_call(
        _sin_emb_kernel,
        out_shape=jax.ShapeDtypeStruct((b, dim), out_dtype),
        grid=grid,
        in_specs=[
            pl.BlockSpec((tb, 1), lambda i: (i, 0)),            # batch tile of time
            pl.BlockSpec((1, dim), lambda i: (0, 0)),           # resident freqs
            pl.BlockSpec((1, dim), lambda i: (0, 0)),           # resident phase
        ],
        out_specs=pl.BlockSpec((tb, dim), lambda i: (i, 0)),
        compiler_params=compiler_params,
    )(t2d, freqs_full, phase_row)


# ---------------------------------------------------------------------------
# Pure-JAX reference (exact PyTorch semantics) + smoke tests
# ---------------------------------------------------------------------------
def _reference(time: jax.Array, dim: int) -> jax.Array:
    half_dim = dim // 2
    emb = math.log(10000.0) / (half_dim - 1)
    emb = jnp.exp(jnp.arange(half_dim, dtype=jnp.float32) * -emb)
    emb = time[:, None].astype(jnp.float32) * emb[None, :]
    return jnp.concatenate([jnp.sin(emb), jnp.cos(emb)], axis=-1)


if __name__ == "__main__":
    key = jax.random.PRNGKey(0)

    # Case 1: small diffusion-style shape, dim < 128 -> lane-packed path.
    b1, d1 = 8, 32
    t1 = jax.random.uniform(key, (b1,), dtype=jnp.float32) * 1000.0
    o1 = jax.block_until_ready(sinusoidal_pos_emb(t1, d1))
    r1 = _reference(t1, d1)
    assert o1.shape == (b1, d1), o1.shape
    # sin(x + pi/2) vs cos(x): argument rounding at |x| ~ 1e3 gives ~1e-4 abs diff.
    assert jnp.allclose(o1, r1, atol=5e-4, rtol=1e-5), "mismatch vs reference (packed)"

    # Case 2: dim >= 128, multi-step batch grid (4 steps of 16 rows), f32 out.
    b2, d2 = 64, 256
    t2 = jax.random.uniform(jax.random.PRNGKey(1), (b2,), dtype=jnp.float32) * 1000.0
    o2 = jax.block_until_ready(sinusoidal_pos_emb(t2, d2, block_rows=16))
    r2 = _reference(t2, d2)
    assert o2.shape == (b2, d2), o2.shape
    assert jnp.allclose(o2, r2, atol=5e-4, rtol=1e-5), "mismatch vs reference (gridded)"

    # Case 3: bf16 writeback (halves HBM bytes); in-kernel math stays f32.
    b3, d3 = 32, 128
    t3 = jax.random.uniform(jax.random.PRNGKey(2), (b3,), dtype=jnp.float32) * 1000.0
    o3 = jax.block_until_ready(sinusoidal_pos_emb(t3, d3, out_dtype=jnp.bfloat16))
    r3 = _reference(t3, d3)
    assert o3.dtype == jnp.bfloat16
    assert jnp.allclose(o3.astype(jnp.float32), r3, atol=2e-2, rtol=0), \
        "mismatch vs reference (bf16)"

    print("KERNEL_OK")
</pallas_src>

<mosaic_0001>
module attributes {stable_mosaic.version = 11 : i64} {
  func.func @_sin_emb_packed_kernel(%arg0: i32, %arg1: memref<2x4xf32, #tpu.memory_space<vmem>>, %arg2: memref<4x128xf32, #tpu.memory_space<vmem>>, %arg3: memref<1x128xf32, #tpu.memory_space<vmem>>, %arg4: memref<2x128xf32, #tpu.memory_space<vmem>>) attributes {dimension_semantics = [#tpu.dimension_semantics<parallel>], iteration_bounds = array<i64: 1>, scalar_prefetch = 0 : i64, scratch_operands = 0 : i64, tpu.core_type = #tpu.core_type<tc>, window_params = [{transform_indices = @transform_0, window_bounds = array<i64: 2, 4>}, {pipeline_mode = #tpu.pipeline_mode<synchronous>, transform_indices = @transform_1, window_bounds = array<i64: 4, 128>}, {pipeline_mode = #tpu.pipeline_mode<synchronous>, transform_indices = @transform_2, window_bounds = array<i64: 1, 128>}, {transform_indices = @transform_3, window_bounds = array<i64: 2, 128>}]} {
    %c0 = arith.constant 0 : index
    %c0_0 = arith.constant 0 : index
    %0 = vector.load %arg1[%c0, %c0_0] : memref<2x4xf32, #tpu.memory_space<vmem>>, vector<2x4xf32>
    %c0_1 = arith.constant 0 : index
    %c0_2 = arith.constant 0 : index
    %1 = vector.load %arg2[%c0_1, %c0_2] : memref<4x128xf32, #tpu.memory_space<vmem>>, vector<4x128xf32>
    %cst = arith.constant dense<0.000000e+00> : vector<2x128xf32>
    %2 = tpu.matmul %0, %1, %cst {dimension_numbers = #tpu.dot_dimension_numbers<[1], [0], [0], [1], [0, 0, 1, 1], [], []>, precision = #tpu.contract_precision<fp32>} : vector<2x4xf32>, vector<4x128xf32>, vector<2x128xf32> -> vector<2x128xf32>
    %c0_3 = arith.constant 0 : index
    %c0_4 = arith.constant 0 : index
    %3 = vector.load %arg3[%c0_3, %c0_4] : memref<1x128xf32, #tpu.memory_space<vmem>>, vector<1x128xf32>
    %4 = vector.broadcast %3 : vector<1x128xf32> to vector<2x128xf32>
    %5 = arith.addf %2, %4 : vector<2x128xf32>
    %6 = math.sin %5 : vector<2x128xf32>
    %c0_5 = arith.constant 0 : index
    %c0_6 = arith.constant 0 : index
    %7 = vector.load %arg4[%c0_5, %c0_6] : memref<2x128xf32, #tpu.memory_space<vmem>>, vector<2x128xf32>
    tpu.vector_store %arg4[%c0_5, %c0_6], %6 {strides = array<i32>} : memref<2x128xf32, #tpu.memory_space<vmem>>, vector<2x128xf32>,
    return
  }
  func.func @transform_0(%arg0: i32) -> (i32, i32) {
    %c0_i32 = arith.constant 0 : i32
    %c0_i32_0 = arith.constant 0 : i32
    return %arg0, %c0_i32 : i32, i32
  }
  func.func @transform_1(%arg0: i32) -> (i32, i32) {
    %c0_i32 = arith.constant 0 : i32
    %c0_i32_0 = arith.constant 0 : i32
    %c0_i32_1 = arith.constant 0 : i32
    return %c0_i32, %c0_i32_0 : i32, i32
  }
  func.func @transform_2(%arg0: i32) -> (i32, i32) {
    %c0_i32 = arith.constant 0 : i32
    %c0_i32_0 = arith.constant 0 : i32
    %c0_i32_1 = arith.constant 0 : i32
    return %c0_i32, %c0_i32_0 : i32, i32
  }
  func.func @transform_3(%arg0: i32) -> (i32, i32) {
    %c0_i32 = arith.constant 0 : i32
    %c0_i32_0 = arith.constant 0 : i32
    return %arg0, %c0_i32 : i32, i32
  }
}

</mosaic_0001>

<llo_original>
// kernel: tpu_custom_call.1
$region0: #{tpu_custom_call.1}
  #allocation0 [shape = 'u32[]', space=smem, size = 0x4, offset = 0x4, fixed_abs, tag = 'smem constant byte address 0x4 - core index']
  #allocation1 [shape = 'u32[72,128]{1,0:T(1,128)}', space=vmem, size = 0x9000, scoped, tag = 'internal scratch']
  %s0 = inlined_call_operand.hbm [shape: f32[2,4], index: 0, kind: input, shape index: {}]
  %s1 = inlined_call_operand.hbm [shape: f32[4,128], index: 1, kind: input, shape index: {}]
  %s2 = inlined_call_operand.vmem [shape: f32[1,128], index: 2, kind: input, shape index: {}]
  %s3 = inlined_call_operand.hbm [shape: f32[2,128], index: 3, kind: output, shape index: {}]
  %s4 = sld [smem:[#allocation0]]
  $region30: #{tpu_custom_call.1} parent=0
    _
  %s6 = ssub.s32 1, %s4
  %s7 = scalar_select 0, %s6, %s4
  $region1: #{tpu_custom_call.1} parent=0
    #allocation2 [shape = 'u8[1024]{0}', space=vmem, size = 0x400, scoped, tag = 'input window, operand 0, single buffered']
    #allocation3 [shape = 's32[1]{0}', space=sflag, size = 0x4, scoped, tag = 'scoped memory for tpu_custom_call.1']
    #allocation4 [shape = 's32[1]{0}', space=sflag, size = 0x4, scoped, tag = 'scoped memory for tpu_custom_call.1']
    #allocation5 [shape = 'u8[2048]{0}', space=vmem, size = 0x800, scoped, tag = 'input window, operand 1, single buffered']
    #allocation6 [shape = 's32[1]{0}', space=sflag, size = 0x4, scoped, tag = 'scoped memory for tpu_custom_call.1']
    #allocation7 [shape = 'u8[1024]{0}', space=vmem, size = 0x400, scoped, tag = 'output window, operand 0, single buffered']
    %8 = vsyncpa [#allocation3], 0
    %9 = vsyncpa [#allocation6], 0
    %10 = vsyncpa [#allocation4], 0
    // Predicated region
    $region2: #{tpu_custom_call.1} parent=1 // pred_check
      _
    $region3: #{tpu_custom_call.1} parent=1 // pred_check_branch
      %12 = sbr.rel (0) target = $region5
    $region4: #{tpu_custom_call.1} parent=1 // pred_region
      %14 = vsyncadd [#allocation3], 0
      %s16 = sshll.u32 %s0, 4
      %s17 = int_to_ptr.hbm [resolvable:$true] %s16
      %s18 = sshll.u32 [#allocation2], 4
      %s19 = int_to_ptr.vmem [resolvable:$true] %s18
      %21 = dma.hbm_to_vmem [thread:$0]  %s17, 32, %s19, [#allocation3]
    $region5: #{tpu_custom_call.1} parent=1 // pred_fallthru
      _
    // Predicated region
    $region6: #{tpu_custom_call.1} parent=1 // pred_check
      _
    $region7: #{tpu_custom_call.1} parent=1 // pred_check_branch
      %23 = sbr.rel (0) target = $region9
    $region8: #{tpu_custom_call.1} parent=1 // pred_region
      %25 = vsyncadd [#allocation6], 0
      %s27 = sshll.u32 %s1, 4
      %s28 = int_to_ptr.hbm [resolvable:$true] %s27
      %s29 = sshll.u32 [#allocation5], 4
      %s30 = int_to_ptr.vmem [resolvable:$true] %s29
      %32 = dma.hbm_to_vmem [thread:$0]  %s28, 64, %s30, [#allocation6]
    $region9: #{tpu_custom_call.1} parent=1 // pred_fallthru
      _
    // Predicated region
    $region10: #{tpu_custom_call.1} parent=1 // pred_check
      _
    $region11: #{tpu_custom_call.1} parent=1 // pred_check_branch
      %34 = sbr.rel (0) target = $region13
    $region12: #{tpu_custom_call.1} parent=1 // pred_region
      _
    $region13: #{tpu_custom_call.1} parent=1 // pred_fallthru
      _
    // Predicated region
    $region14: #{tpu_custom_call.1} parent=1 // pred_check
      _
    $region15: #{tpu_custom_call.1} parent=1 // pred_check_branch
      %36 = sbr.rel (0) target = $region17
    $region16: #{tpu_custom_call.1} parent=1 // pred_region
      %38 = dma.done [#allocation3], 32
    $region17: #{tpu_custom_call.1} parent=1 // pred_fallthru
      _
    // Predicated region
    $region18: #{tpu_custom_call.1} parent=1 // pred_check
      _
    $region19: #{tpu_custom_call.1} parent=1 // pred_check_branch
      %40 = sbr.rel (0) target = $region21
    $region20: #{tpu_custom_call.1} parent=1 // pred_region
      %42 = dma.done [#allocation6], 64
    $region21: #{tpu_custom_call.1} parent=1 // pred_fallthru
      _
    %v43 = vld [vmem:[#allocation2] sm:$0x3]
    %v44 = vld [vmem:[#allocation5] sm:$0xf]
    %v45 = vld [vmem:[%s2] sm:$0x1]
    %v47 = vperm.slane %v45, 0
    %vm49 = vcmask 31744
    %v51 = vsel %vm49, %v43, 0
    %vm53 = vcmask 1043456
    %v55 = vsel %vm53, %v44, 0
    %57 = vmatpush.msra.mxu0 0.0
    %58 = vmatpush.msra.mxu0 0.0
    %59 = vmatpush.msra.mxu0 0.0
    %60 = vmatpush.msra.mxu0 0.0
    %61 = vmatpush.msra.mxu0 0.0
    %62 = vmatpush.msra.mxu0 0.0
    %63 = vmatpush.msra.mxu0 0.0
    %64 = vmatpush.msra.mxu0 0.0
    %65 = vmatpush.msra.mxu0 0.0
    %66 = vmatpush.msra.mxu0 0.0
    %67 = vmatpush.msra.mxu0 0.0
    %68 = vmatpush.msra.mxu0 0.0
    %69 = vmatpush.msra.mxu0 0.0
    %70 = vmatpush.msra.mxu0 0.0
    %71 = vmatpush.msra.mxu0 0.0
    %v72 = vand.u32 %v55, 4294901760
    %73 = vmatpush.msra.mxu0 %v72
    %v74 = vand.u32 %v51, 4294901760
    %v75 = vsub.f32 %v51, %v74
    %v76 = vand.u32 %v75, 4294901760
    %v77 = vsub.f32 %v75, %v76
    %v78 = vand.u32 %v77, 4294901760
    %79 = vmatmul.f32.gmra.mxu0 %v78
    %v80 = vpop.f32.mrf.mxu0
    %v81 = vadd.f32 %v47, %v80
    %82 = vdwg.mxu0
    %83 = vmatpush.msra.mxu0 0.0
    %84 = vmatpush.msra.mxu0 0.0
    %85 = vmatpush.msra.mxu0 0.0
    %86 = vmatpush.msra.mxu0 0.0
    %87 = vmatpush.msra.mxu0 0.0
    %88 = vmatpush.msra.mxu0 0.0
    %89 = vmatpush.msra.mxu0 0.0
    %90 = vmatpush.msra.mxu0 0.0
    %91 = vmatpush.msra.mxu0 0.0
    %92 = vmatpush.msra.mxu0 0.0
    %93 = vmatpush.msra.mxu0 0.0
    %94 = vmatpush.msra.mxu0 0.0
    %95 = vmatpush.msra.mxu0 0.0
    %96 = vmatpush.msra.mxu0 0.0
    %97 = vmatpush.msra.mxu0 0.0
    %v98 = vand.u32 %v55, 4294901760
    %v99 = vsub.f32 %v55, %v98
    %v100 = vand.u32 %v99, 4294901760
    %v101 = vsub.f32 %v99, %v100
    %v102 = vand.u32 %v101, 4294901760
    %103 = vmatpush.msra.mxu0 %v102
    %v104 = vand.u32 %v51, 4294901760
    %105 = vmatmul.f32.gmra.mxu0 %v104
    %v106 = vpop.f32.mrf.mxu0
    %v107 = vadd.f32 %v81, %v106
    %108 = vdwg.mxu0
    %109 = vmatpush.msra.mxu0 0.0
    %110 = vmatpush.msra.mxu0 0.0
    %111 = vmatpush.msra.mxu0 0.0
    %112 = vmatpush.msra.mxu0 0.0
    %113 = vmatpush.msra.mxu0 0.0
    %114 = vmatpush.msra.mxu0 0.0
    %115 = vmatpush.msra.mxu0 0.0
    %116 = vmatpush.msra.mxu0 0.0
    %117 = vmatpush.msra.mxu0 0.0
    %118 = vmatpush.msra.mxu0 0.0
    %119 = vmatpush.msra.mxu0 0.0
    %120 = vmatpush.msra.mxu0 0.0
    %121 = vmatpush.msra.mxu0 0.0
    %122 = vmatpush.msra.mxu0 0.0
    %123 = vmatpush.msra.mxu0 0.0
    %v124 = vand.u32 %v55, 4294901760
    %v125 = vsub.f32 %v55, %v124
    %126 = vmatpush.msra.mxu0 %v125
    %v127 = vand.u32 %v51, 4294901760
    %v128 = vsub.f32 %v51, %v127
    %129 = vmatmul.f32.gmra.mxu0 %v128
    %v130 = vpop.f32.mrf.mxu0
    %v131 = vadd.f32 %v107, %v130
    %132 = vdwg.mxu0
    %133 = vmatpush.msra.mxu0 0.0
    %134 = vmatpush.msra.mxu0 0.0
    %135 = vmatpush.msra.mxu0 0.0
    %136 = vmatpush.msra.mxu0 0.0
    %137 = vmatpush.msra.mxu0 0.0
    %138 = vmatpush.msra.mxu0 0.0
    %139 = vmatpush.msra.mxu0 0.0
    %140 = vmatpush.msra.mxu0 0.0
    %141 = vmatpush.msra.mxu0 0.0
    %142 = vmatpush.msra.mxu0 0.0
    %143 = vmatpush.msra.mxu0 0.0
    %144 = vmatpush.msra.mxu0 0.0
    %145 = vmatpush.msra.mxu0 0.0
    %146 = vmatpush.msra.mxu0 0.0
    %147 = vmatpush.msra.mxu0 0.0
    %v148 = vand.u32 %v55, 4294901760
    %149 = vmatpush.msra.mxu0 %v148
    %v150 = vand.u32 %v51, 4294901760
    %v151 = vsub.f32 %v51, %v150
    %v152 = vand.u32 %v151, 4294901760
    %153 = vmatmul.f32.gmra.mxu0 %v152
    %v154 = vpop.f32.mrf.mxu0
    %v155 = vadd.f32 %v131, %v154
    %156 = vdwg.mxu0
    %157 = vmatpush.msra.mxu0 0.0
    %158 = vmatpush.msra.mxu0 0.0
    %159 = vmatpush.msra.mxu0 0.0
    %160 = vmatpush.msra.mxu0 0.0
    %161 = vmatpush.msra.mxu0 0.0
    %162 = vmatpush.msra.mxu0 0.0
    %163 = vmatpush.msra.mxu0 0.0
    %164 = vmatpush.msra.mxu0 0.0
    %165 = vmatpush.msra.mxu0 0.0
    %166 = vmatpush.msra.mxu0 0.0
    %167 = vmatpush.msra.mxu0 0.0
    %168 = vmatpush.msra.mxu0 0.0
    %169 = vmatpush.msra.mxu0 0.0
    %170 = vmatpush.msra.mxu0 0.0
    %171 = vmatpush.msra.mxu0 0.0
    %v172 = vand.u32 %v55, 4294901760
    %v173 = vsub.f32 %v55, %v172
    %v174 = vand.u32 %v173, 4294901760
    %175 = vmatpush.msra.mxu0 %v174
    %v176 = vand.u32 %v51, 4294901760
    %177 = vmatmul.f32.gmra.mxu0 %v176
    %v178 = vpop.f32.mrf.mxu0
    %v179 = vadd.f32 %v155, %v178
    %180 = vdwg.mxu0
    %181 = vmatpush.msra.mxu0 0.0
    %182 = vmatpush.msra.mxu0 0.0
    %183 = vmatpush.msra.mxu0 0.0
    %184 = vmatpush.msra.mxu0 0.0
    %185 = vmatpush.msra.mxu0 0.0
    %186 = vmatpush.msra.mxu0 0.0
    %187 = vmatpush.msra.mxu0 0.0
    %188 = vmatpush.msra.mxu0 0.0
    %189 = vmatpush.msra.mxu0 0.0
    %190 = vmatpush.msra.mxu0 0.0
    %191 = vmatpush.msra.mxu0 0.0
    %192 = vmatpush.msra.mxu0 0.0
    %193 = vmatpush.msra.mxu0 0.0
    %194 = vmatpush.msra.mxu0 0.0
    %195 = vmatpush.msra.mxu0 0.0
    %v196 = vand.u32 %v55, 4294901760
    %197 = vmatpush.msra.mxu0 %v196
    %v198 = vand.u32 %v51, 4294901760
    %199 = vmatmul.f32.gmra.mxu0 %v198
    %v200 = vpop.f32.mrf.mxu0
    %v201 = vadd.f32 %v179, %v200
    %202 = vdwg.mxu0
    %v203 = vand.u32 2147483647, %v201
    %vm204 = vcmp.le.f32.partialorder %v203, 0.7853982
    %vm205 = vcmp.lt.s32.totalorder %v201, 0
    %v206 = vand.u32 %v201, 2139095040
    %v207 = vshrl.u32 %v206, 23
    %v208 = vsub.s32 %v207, 127
    %v209 = vand.u32 2147483647, %v201
    %v210 = vand.u32 %v209, 8388607
    %v211 = vor.u32 %v210, 8388608
    %v212 = vsub.s32 0, %v211
    %v213 = vadd.s32 %v208, 1
    %vm214 = vcmp.gt.s32.totalorder %v213, 0
    %v215 = vsel %vm214, %v213, 0
    %v216 = vshrl.u32 %v215, 5
    %v217 = vand.u32 %v215, 31
    %v218 = vsub.s32 32, %v217
    %v219 = vshrl.u32 683565275, %v218
    %v220 = vshll.u32 683565275, %v217
    %v221 = vshrl.u32 2475754826, %v218
    %v222 = vor.u32 %v220, %v221
    %v223 = vshll.u32 2475754826, %v217
    %v224 = vshrl.u32 2131351028, %v218
    %v225 = vor.u32 %v223, %v224
    %v226 = vshll.u32 2131351028, %v217
    %v227 = vshrl.u32 2102212464, %v218
    %v228 = vor.u32 %v226, %v227
    %v229 = vshll.u32 2102212464, %v217
    %v230 = vshrl.u32 920167782, %v218
    %v231 = vor.u32 %v229, %v230
    %v232 = vshll.u32 920167782, %v217
    %v233 = vshrl.u32 1326507024, %v218
    %v234 = vor.u32 %v232, %v233
    %vm235 = vcmp.lt.s32.totalorder %v216, 1
    %vm236 = vcmp.lt.s32.totalorder %v216, 2
    %vm237 = vcmp.lt.s32.totalorder %v216, 3
    %vm238 = vcmp.lt.s32.totalorder %v216, 4
    %v239 = vsel %vm235, %v219, %v222
    %v240 = vsel %vm238, %v228, 2102212464
    %v241 = vsel %vm237, %v225, %v240
    %v242 = vsel %vm236, %v239, %v241
    %v243 = vsel %vm235, %v222, %v225
    %v244 = vsel %vm238, %v231, 920167782
    %v245 = vsel %vm237, %v228, %v244
    %v246 = vsel %vm236, %v243, %v245
    %v247 = vsel %vm235, %v225, %v228
    %v248 = vsel %vm238, %v234, 1326507024
    %v249 = vsel %vm237, %v231, %v248
    %v250 = vsel %vm236, %v247, %v249
    %v251 = vshll.u32 %v211, 8
    %v252 = vand.u32 %v251, 65535
    %v253 = vshrl.u32 %v251, 16
    %v254 = vand.u32 %v250, 65535
    %v255 = vshrl.u32 %v250, 16
    %v256 = vmul.u32 %v252, %v254
    %v257 = vmul.u32 %v252, %v255
    %v258 = vmul.u32 %v253, %v254
    %v259 = vmul.u32 %v253, %v255
    %v260 = vshll.u32 %v257, 16
    %v261 = vshrl.u32 %v257, 16
    %v262 = vshll.u32 %v258, 16
    %v263 = vshrl.u32 %v258, 16
    %vm264 = vc.u32 %v256, %v260
    %v265 = vsel %vm264, 1, 0
    %v266 = vadd.s32 %v256, %v260
    %v267 = vadd.s32 %v259, %v265
    %vm268 = vc.u32 %v266, %v262
    %v269 = vsel %vm268, 1, 0
    %v270 = vadd.s32 %v266, %v262
    %v271 = vadd.s32 %v267, %v269
    %v272 = vadd.s32 %v271, %v261
    %v273 = vadd.s32 %v272, %v263
    %v274 = vand.u32 %v251, 65535
    %v275 = vshrl.u32 %v251, 16
    %v276 = vand.u32 %v246, 65535
    %v277 = vshrl.u32 %v246, 16
    %v278 = vmul.u32 %v274, %v276
    %v279 = vmul.u32 %v274, %v277
    %v280 = vmul.u32 %v275, %v276
    %v281 = vmul.u32 %v275, %v277
    %v282 = vshll.u32 %v279, 16
    %v283 = vshrl.u32 %v279, 16
    %v284 = vshll.u32 %v280, 16
    %v285 = vshrl.u32 %v280, 16
    %vm286 = vc.u32 %v278, %v282
    %v287 = vsel %vm286, 1, 0
    %v288 = vadd.s32 %v278, %v282
    %v289 = vadd.s32 %v281, %v287
    %vm290 = vc.u32 %v288, %v284
    %v291 = vsel %vm290, 1, 0
    %v292 = vadd.s32 %v288, %v284
    %v293 = vadd.s32 %v289, %v291
    %v294 = vadd.s32 %v293, %v283
    %v295 = vadd.s32 %v294, %v285
    %v296 = vmul.u32 %v251, %v242
    %v297 = vadd.s32 %v273, %v292
    %vm298 = vc.u32 %v273, %v292
    %v299 = vadd.s32 %v295, 1
    %v300 = vsel %vm298, %v299, %v295
    %v301 = vadd.s32 %v296, %v300
    %v302 = vadd.s32 %v301, 536870912
    %v303 = vshrl.u32 %v302, 30
    %v304 = vshll.u32 %v303, 30
    %v305 = vsub.s32 %v301, %v304
    %vm306 = vcmp.lt.s32.totalorder %v305, 0
    %v307 = vsub.s32 0, %v305
    %v308 = vsel %vm306, %v307, %v305
    %v309 = vclz %v308
    %v310 = vsub.s32 %v309, 2
    %vm311 = vcmp.gt.s32.totalorder 0, %v310
    %v312 = vsel %vm311, 0, %v310
    %v313 = vsub.s32 32, %v312
    %v314 = vshll.u32 %v305, %v312
    %v315 = vshrl.u32 %v297, %v313
    %v316 = vor.u32 %v314, %v315
    %v317 = vsub.s32 4294967266, %v312
    %v318 = vadd.s32 %v317, 127
    %v319 = vshll.u32 %v318, 23
    %v320 = vor.u32 4788187, %v319
    %v321 = vand.u32 2147483647, %v320
    %v323 = vcvt.s32.f32 %v316
    %v324 = vmul.f32 %v323, %v321
    %v325 = vxor.u32 %v324, 2147483648
    %v326 = vsel %vm205, %v325, %v324
    %v327 = vsub.s32 4, %v303
    %v328 = vsel %vm205, %v327, %v303
    %v329 = vsel %vm204, %v201, %v326
    %v330 = vsel %vm204, 0, %v328
    %v331 = vmul.f32 %v329, %v329
    %v332 = vmul.f32 %v331, -0.001358992
    %v333 = vadd.f32 %v332, 0.041655596
    %v334 = vmul.f32 %v331, %v333
    %v335 = vadd.f32 %v334, -0.4999988
    %v336 = vmul.f32 %v331, %v335
    %v337 = vadd.f32 1.0, %v336
    %v338 = vmul.f32 %v329, %v329
    %v339 = vmul.f32 %v338, -0.00019511016
    %v340 = vadd.f32 %v339, 0.008332121
    %v341 = vmul.f32 %v338, %v340
    %v342 = vadd.f32 %v341, -0.16666654
    %v343 = vmul.f32 %v338, %v342
    %v344 = vadd.f32 %v343, 1.0
    %v345 = vmul.f32 %v344, %v329
    %vm346 = vweird.f32 %v201
    %v347 = vadd.s32 %v330, 3
    %v348 = vand.u32 %v347, 3
    %vm349 = vcmp.lt.s32.totalorder %v348, 2
    %vm350 = vcmp.eq.s32.totalorder %v348, 0
    %v351 = vxor.u32 %v345, 2147483648
    %v352 = vsel %vm350, %v337, %v351
    %vm353 = vcmp.eq.s32.totalorder %v348, 2
    %v354 = vxor.u32 %v337, 2147483648
    %v355 = vsel %vm353, %v354, %v345
    %v356 = vsel %vm349, %v352, %v355
    %v357 = vsel %vm346, nan, %v356
    %358 = vst [vmem:[#allocation7] sm:$0x3] %v357
    // Predicated region
    $region22: #{tpu_custom_call.1} parent=1 // pred_check
      _
    $region23: #{tpu_custom_call.1} parent=1 // pred_check_branch
      %360 = sbr.rel (0) target = $region25
    $region24: #{tpu_custom_call.1} parent=1 // pred_region
      %362 = vsyncadd [#allocation4], 0
      %s364 = sshll.u32 [#allocation7], 4
      %s365 = int_to_ptr.vmem [resolvable:$true] %s364
      %s366 = sshll.u32 %s3, 4
      %s367 = int_to_ptr.hbm [resolvable:$true] %s366
      %369 = dma.vmem_to_hbm [thread:$0]  %s365, 32, %s367, [#allocation4]
    $region25: #{tpu_custom_call.1} parent=1 // pred_fallthru
      _
    // Predicated region
    $region26: #{tpu_custom_call.1} parent=1 // pred_check
      _
    $region27: #{tpu_custom_call.1} parent=1 // pred_check_branch
      %371 = sbr.rel (0) target = $region29
    $region28: #{tpu_custom_call.1} parent=1 // pred_region
      %373 = dma.done [#allocation4], 32
    $region29: #{tpu_custom_call.1} parent=1 // pred_fallthru
      _
    %374 = vsyncpa [#allocation3], 1
    %375 = vsyncpa [#allocation6], 1
    %376 = vsyncpa [#allocation4], 1

</llo_original>
